<compile_context>
chip_gen: v7x
topology: tpu7x:2x2x1
jax: 0.10.0
libtpu: 0.0.40
codegen_flags: <defaults>
</compile_context>

<pallas_src>
import numpy as np
import jax
import jax.numpy as jnp
from jax.experimental import pallas as pl
from jax.experimental.pallas import tpu as pltpu

# --- model hyper-parameters (consistent with the module) ---------------------
BELIEF_SIZE = 32
STATE_SIZE = 16
HIDDEN_SIZE = 32
IN_SIZE = BELIEF_SIZE + STATE_SIZE        # 48

LANE = 128          # feature dims zero-padded to one full lane width
SUB_BATCH = 128     # batch rows packed into one lane-dense output row
MAX_TILE = 1024     # max batch rows per grid step (multiple of 256 and 128)

# Packed bf16 parameter slab: row offsets (all multiples of the bf16 sublane
# tile of 16, so every slice below is an aligned sublane window).
W1_OFF = 0          # rows   0..127 : W1 (48 x 32 real, stored (in, out))
W2_OFF = 128        # rows 128..255 : W2 (32 x 32 real)
W3_OFF = 256        # rows 256..383 : W3 (32 x 32 real)
W4_OFF = 384        # rows 384..511 : W4 stored TRANSPOSED as a row (row 384)
B_OFF = 512         # rows 512..527 : biases (row 512+k = b_{k+1}); b4 lane-replicated
SLAB_ROWS = 528

BATCH = 64


def pcont_kernel(belief_ref, state_ref, slab_ref, out_ref):
    f32 = jnp.float32
    bf16 = jnp.bfloat16

    # Biases (tiny load). Rows 0..2: b1..b3 in lanes 0..31 (rest 0, so padded
    # hidden lanes stay exactly 0 through the ReLU chain); row 3: b4
    # replicated across all 128 lanes (added to the lane-dense logit row).
    bias = slab_ref[B_OFF:B_OFF + 16, :].astype(f32)                    # (16,128)

    # ---- layer 1:  [belief, state] @ W1 == belief @ W1[:32] + state @ W1[32:48]
    w1b = slab_ref[W1_OFF:W1_OFF + BELIEF_SIZE, :]                      # (32,128) bf16
    h = jnp.dot(belief_ref[...], w1b, preferred_element_type=f32)
    w1s = slab_ref[W1_OFF + BELIEF_SIZE:W1_OFF + IN_SIZE, :]            # (16,128) bf16
    h = h + jnp.dot(state_ref[...], w1s, preferred_element_type=f32)
    h = jnp.maximum(h + bias[0:1, :], 0.0)                              # (tile,128) f32

    # ---- layer 2 (weight loaded right before its dot -> bounded live range)
    w2 = slab_ref[W2_OFF:W2_OFF + LANE, :]                              # (128,128) bf16
    h = jnp.maximum(
        jnp.dot(h.astype(bf16), w2, preferred_element_type=f32) + bias[1:2, :], 0.0)

    # ---- layer 3
    w3 = slab_ref[W3_OFF:W3_OFF + LANE, :]                              # (128,128) bf16
    h = jnp.maximum(
        jnp.dot(h.astype(bf16), w3, preferred_element_type=f32) + bias[2:3, :], 0.0)

    # ---- layer 4, lane-dense output: for each 128-row batch chunk c,
    #   out_row_c = w4_row @ h_c^T + b4          -> (1, 128), batch on lanes.
    w4 = slab_ref[W4_OFF:W4_OFF + 16, :]        # (16,128) bf16; only row 0 nonzero
    b4 = bias[3:4, :]                           # (1,128), b4 replicated on lanes
    n_sub = h.shape[0] // SUB_BATCH             # static
    rows = []
    for c in range(n_sub):
        hc_t = h[c * SUB_BATCH:(c + 1) * SUB_BATCH, :].T.astype(bf16)   # (128,128)
        logit = jnp.dot(w4, hc_t, preferred_element_type=f32)[0:1, :] + b4
        rows.append(logit)
    logits = rows[0] if n_sub == 1 else jnp.concatenate(rows, axis=0)   # (n_sub,128)

    # Numerically-stable sigmoid: exp on the EUP, divide via approx reciprocal
    # (also EUP), select on the VPU.  Padded batch lanes hold sigmoid(b4) and
    # are discarded by the wrapper.
    z = jnp.exp(-jnp.abs(logits))
    r = pl.reciprocal(1.0 + z, approx=True)
    out_ref[...] = jnp.where(logits >= 0.0, r, z * r)


def init_params(key):
    """PyTorch nn.Linear default init (uniform +-1/sqrt(fan_in)); weights are
    stored as (in_features, out_features), i.e. transposed vs torch."""
    sizes = [
        (IN_SIZE, HIDDEN_SIZE),
        (HIDDEN_SIZE, HIDDEN_SIZE),
        (HIDDEN_SIZE, HIDDEN_SIZE),
        (HIDDEN_SIZE, 1),
    ]
    params = {}
    for idx, (fin, fout) in enumerate(sizes, start=1):
        key, kw, kb = jax.random.split(key, 3)
        bound = 1.0 / np.sqrt(fin)
        params[f"w{idx}"] = jax.random.uniform(
            kw, (fin, fout), jnp.float32, -bound, bound)
        params[f"b{idx}"] = jax.random.uniform(
            kb, (fout,), jnp.float32, -bound, bound)
    return params


def pack_params(params):
    """Pack all weights/biases into one lane-aligned bf16 (SLAB_ROWS, 128) slab."""
    slab = jnp.zeros((SLAB_ROWS, LANE), jnp.float32)
    slab = slab.at[W1_OFF:W1_OFF + IN_SIZE, :HIDDEN_SIZE].set(params["w1"])
    slab = slab.at[W2_OFF:W2_OFF + HIDDEN_SIZE, :HIDDEN_SIZE].set(params["w2"])
    slab = slab.at[W3_OFF:W3_OFF + HIDDEN_SIZE, :HIDDEN_SIZE].set(params["w3"])
    # fc4 weight stored transposed as a single row (used as w4_row @ h^T).
    slab = slab.at[W4_OFF, :HIDDEN_SIZE].set(params["w4"][:, 0])
    slab = slab.at[B_OFF + 0, :HIDDEN_SIZE].set(params["b1"])
    slab = slab.at[B_OFF + 1, :HIDDEN_SIZE].set(params["b2"])
    slab = slab.at[B_OFF + 2, :HIDDEN_SIZE].set(params["b3"])
    slab = slab.at[B_OFF + 3, :].set(jnp.full((LANE,), params["b4"][0]))
    return slab.astype(jnp.bfloat16)


def _round_up(x, m):
    return ((x + m - 1) // m) * m


@jax.jit
def pcont_forward(belief, state, slab):
    """p = sigmoid(fc4(relu(fc3(relu(fc2(relu(fc1([belief, state])))))))).squeeze(1)"""
    B = belief.shape[0]
    b_pad = _round_up(max(B, 1), SUB_BATCH)
    if b_pad <= MAX_TILE:
        tile = b_pad                      # single grid step: no duplicated slab DMA
    else:
        b_pad = _round_up(B, MAX_TILE)
        tile = MAX_TILE                   # multiple of 256 -> fills the MXU M dim
    n_sub = tile // SUB_BATCH
    grid = b_pad // tile

    belief16 = belief.astype(jnp.bfloat16)
    state16 = state.astype(jnp.bfloat16)
    if b_pad != B:                        # zero-pad batch only (no padded-x slab)
        belief16 = jnp.pad(belief16, ((0, b_pad - B), (0, 0)))
        state16 = jnp.pad(state16, ((0, b_pad - B), (0, 0)))

    out = pl.pallas_call(
        pcont_kernel,
        grid=(grid,),
        in_specs=[
            pl.BlockSpec((tile, BELIEF_SIZE), lambda i: (i, 0)),
            pl.BlockSpec((tile, STATE_SIZE), lambda i: (i, 0)),
            # Constant block index -> the slab is DMA'd once, not per grid step.
            pl.BlockSpec((SLAB_ROWS, LANE), lambda i: (0, 0)),
        ],
        out_specs=pl.BlockSpec((n_sub, LANE), lambda i: (i, 0)),
        out_shape=jax.ShapeDtypeStruct((b_pad // SUB_BATCH, LANE), jnp.float32),
        compiler_params=pltpu.CompilerParams(
            dimension_semantics=("parallel",)),
    )(belief16, state16, slab)

    # out[r, j] holds p for batch row r*128 + j; flatten and trim the padding.
    return out.reshape(-1)[:B]


def pcont_reference(belief, state, params):
    """Pure-JAX f32 reference matching the PyTorch module."""
    x = jnp.concatenate([belief, state], axis=-1).astype(jnp.float32)
    h = jax.nn.relu(x @ params["w1"] + params["b1"])
    h = jax.nn.relu(h @ params["w2"] + params["b2"])
    h = jax.nn.relu(h @ params["w3"] + params["b3"])
    return jax.nn.sigmoid((h @ params["w4"] + params["b4"])[:, 0])


if __name__ == "__main__":
    key = jax.random.PRNGKey(0)
    k_belief, k_state, k_params = jax.random.split(key, 3)

    belief = jax.random.normal(k_belief, (BATCH, BELIEF_SIZE), jnp.float32)
    state = jax.random.normal(k_state, (BATCH, STATE_SIZE), jnp.float32)
    params = init_params(k_params)
    slab = pack_params(params)

    p = pcont_forward(belief, state, slab)
    jax.block_until_ready(p)

    p_ref = pcont_reference(belief, state, params)

    assert p.shape == (BATCH,)
    assert bool(jnp.all(jnp.isfinite(p)))
    assert bool(jnp.all((p > 0.0) & (p < 1.0)))
    # bf16 MXU operands vs. f32 reference -> looser tolerance than the all-f32 path.
    assert bool(jnp.allclose(p, p_ref, atol=2e-2, rtol=2e-2))
    print("KERNEL_OK")
</pallas_src>

<mosaic_0001>
module attributes {stable_mosaic.version = 11 : i64} {
  func.func @pcont_kernel(%arg0: i32, %arg1: memref<128x32xbf16, #tpu.memory_space<vmem>>, %arg2: memref<128x16xbf16, #tpu.memory_space<vmem>>, %arg3: memref<528x128xbf16, #tpu.memory_space<vmem>>, %arg4: memref<1x128xf32, #tpu.memory_space<vmem>>) attributes {dimension_semantics = [#tpu.dimension_semantics<parallel>], iteration_bounds = array<i64: 1>, scalar_prefetch = 0 : i64, scratch_operands = 0 : i64, tpu.core_type = #tpu.core_type<tc>, window_params = [{transform_indices = @transform_0, window_bounds = array<i64: 128, 32>}, {transform_indices = @transform_1, window_bounds = array<i64: 128, 16>}, {pipeline_mode = #tpu.pipeline_mode<synchronous>, transform_indices = @transform_2, window_bounds = array<i64: 528, 128>}, {transform_indices = @transform_3, window_bounds = array<i64: 1, 128>}]} {
    %c512 = arith.constant 512 : index
    %c0 = arith.constant 0 : index
    %0 = vector.load %arg3[%c512, %c0] : memref<528x128xbf16, #tpu.memory_space<vmem>>, vector<16x128xbf16>
    %1 = arith.extf %0 : vector<16x128xbf16> to vector<16x128xf32>
    %c0_0 = arith.constant 0 : index
    %c0_1 = arith.constant 0 : index
    %2 = vector.load %arg3[%c0_0, %c0_1] : memref<528x128xbf16, #tpu.memory_space<vmem>>, vector<32x128xbf16>
    %c0_2 = arith.constant 0 : index
    %c0_3 = arith.constant 0 : index
    %3 = vector.load %arg1[%c0_2, %c0_3] : memref<128x32xbf16, #tpu.memory_space<vmem>>, vector<128x32xbf16>
    %cst = arith.constant dense<0.000000e+00> : vector<128x128xf32>
    %4 = tpu.matmul %3, %2, %cst {dimension_numbers = #tpu.dot_dimension_numbers<[1], [0], [0], [1], [0, 0, 1, 1], [], []>} : vector<128x32xbf16>, vector<32x128xbf16>, vector<128x128xf32> -> vector<128x128xf32>
    %c32 = arith.constant 32 : index
    %c0_4 = arith.constant 0 : index
    %5 = vector.load %arg3[%c32, %c0_4] : memref<528x128xbf16, #tpu.memory_space<vmem>>, vector<16x128xbf16>
    %c0_5 = arith.constant 0 : index
    %c0_6 = arith.constant 0 : index
    %6 = vector.load %arg2[%c0_5, %c0_6] : memref<128x16xbf16, #tpu.memory_space<vmem>>, vector<128x16xbf16>
    %cst_7 = arith.constant dense<0.000000e+00> : vector<128x128xf32>
    %7 = tpu.matmul %6, %5, %cst_7 {dimension_numbers = #tpu.dot_dimension_numbers<[1], [0], [0], [1], [0, 0, 1, 1], [], []>} : vector<128x16xbf16>, vector<16x128xbf16>, vector<128x128xf32> -> vector<128x128xf32>
    %8 = arith.addf %4, %7 : vector<128x128xf32>
    %9 = vector.extract_strided_slice %1 {offsets = [0, 0], sizes = [1, 128], strides = [1, 1]} : vector<16x128xf32> to vector<1x128xf32>
    %10 = vector.broadcast %9 : vector<1x128xf32> to vector<128x128xf32>
    %11 = arith.addf %8, %10 : vector<128x128xf32>
    %cst_8 = arith.constant 0.000000e+00 : f32
    %12 = vector.broadcast %cst_8 : f32 to vector<128x128xf32>
    %13 = arith.maximumf %11, %12 : vector<128x128xf32>
    %c128 = arith.constant 128 : index
    %c0_9 = arith.constant 0 : index
    %14 = vector.load %arg3[%c128, %c0_9] : memref<528x128xbf16, #tpu.memory_space<vmem>>, vector<128x128xbf16>
    %15 = arith.truncf %13 : vector<128x128xf32> to vector<128x128xbf16>
    %cst_10 = arith.constant dense<0.000000e+00> : vector<128x128xf32>
    %16 = tpu.matmul %15, %14, %cst_10 {dimension_numbers = #tpu.dot_dimension_numbers<[1], [0], [0], [1], [0, 0, 1, 1], [], []>} : vector<128x128xbf16>, vector<128x128xbf16>, vector<128x128xf32> -> vector<128x128xf32>
    %17 = vector.extract_strided_slice %1 {offsets = [1, 0], sizes = [1, 128], strides = [1, 1]} : vector<16x128xf32> to vector<1x128xf32>
    %18 = vector.broadcast %17 : vector<1x128xf32> to vector<128x128xf32>
    %19 = arith.addf %16, %18 : vector<128x128xf32>
    %cst_11 = arith.constant 0.000000e+00 : f32
    %20 = vector.broadcast %cst_11 : f32 to vector<128x128xf32>
    %21 = arith.maximumf %19, %20 : vector<128x128xf32>
    %c256 = arith.constant 256 : index
    %c0_12 = arith.constant 0 : index
    %22 = vector.load %arg3[%c256, %c0_12] : memref<528x128xbf16, #tpu.memory_space<vmem>>, vector<128x128xbf16>
    %23 = arith.truncf %21 : vector<128x128xf32> to vector<128x128xbf16>
    %cst_13 = arith.constant dense<0.000000e+00> : vector<128x128xf32>
    %24 = tpu.matmul %23, %22, %cst_13 {dimension_numbers = #tpu.dot_dimension_numbers<[1], [0], [0], [1], [0, 0, 1, 1], [], []>} : vector<128x128xbf16>, vector<128x128xbf16>, vector<128x128xf32> -> vector<128x128xf32>
    %25 = vector.extract_strided_slice %1 {offsets = [2, 0], sizes = [1, 128], strides = [1, 1]} : vector<16x128xf32> to vector<1x128xf32>
    %26 = vector.broadcast %25 : vector<1x128xf32> to vector<128x128xf32>
    %27 = arith.addf %24, %26 : vector<128x128xf32>
    %cst_14 = arith.constant 0.000000e+00 : f32
    %28 = vector.broadcast %cst_14 : f32 to vector<128x128xf32>
    %29 = arith.maximumf %27, %28 : vector<128x128xf32>
    %c384 = arith.constant 384 : index
    %c0_15 = arith.constant 0 : index
    %30 = vector.load %arg3[%c384, %c0_15] : memref<528x128xbf16, #tpu.memory_space<vmem>>, vector<16x128xbf16>
    %31 = vector.extract_strided_slice %1 {offsets = [3, 0], sizes = [1, 128], strides = [1, 1]} : vector<16x128xf32> to vector<1x128xf32>
    %32 = tpu.transpose %29, [1, 0] : vector<128x128xf32> -> vector<128x128xf32>
    %33 = arith.truncf %32 : vector<128x128xf32> to vector<128x128xbf16>
    %cst_16 = arith.constant dense<0.000000e+00> : vector<16x128xf32>
    %34 = tpu.matmul %30, %33, %cst_16 {dimension_numbers = #tpu.dot_dimension_numbers<[1], [0], [0], [1], [0, 0, 1, 1], [], []>} : vector<16x128xbf16>, vector<128x128xbf16>, vector<16x128xf32> -> vector<16x128xf32>
    %35 = vector.extract_strided_slice %34 {offsets = [0, 0], sizes = [1, 128], strides = [1, 1]} : vector<16x128xf32> to vector<1x128xf32>
    %36 = arith.addf %35, %31 : vector<1x128xf32>
    %37 = math.absf %36 : vector<1x128xf32>
    %cst_17 = arith.constant 0.000000e+00 : f32
    %38 = vector.broadcast %cst_17 : f32 to vector<1x128xf32>
    %39 = arith.subf %38, %37 : vector<1x128xf32>
    %40 = math.exp %39 : vector<1x128xf32>
    %cst_18 = arith.constant 1.000000e+00 : f32
    %41 = vector.broadcast %cst_18 : f32 to vector<1x128xf32>
    %42 = arith.addf %41, %40 : vector<1x128xf32>
    %43 = tpu.reciprocal %42 {approx = true} : vector<1x128xf32> -> vector<1x128xf32>
    %cst_19 = arith.constant 0.000000e+00 : f32
    %44 = vector.broadcast %cst_19 : f32 to vector<1x128xf32>
    %45 = arith.cmpf oge, %36, %44 : vector<1x128xf32>
    %46 = arith.mulf %40, %43 : vector<1x128xf32>
    %47 = arith.select %45, %43, %46 : vector<1x128xi1>, vector<1x128xf32>
    %c0_20 = arith.constant 0 : index
    %c0_21 = arith.constant 0 : index
    %48 = vector.load %arg4[%c0_20, %c0_21] : memref<1x128xf32, #tpu.memory_space<vmem>>, vector<1x128xf32>
    tpu.vector_store %arg4[%c0_20, %c0_21], %47 {strides = array<i32>} : memref<1x128xf32, #tpu.memory_space<vmem>>, vector<1x128xf32>,
    return
  }
  func.func @transform_0(%arg0: i32) -> (i32, i32) {
    %c0_i32 = arith.constant 0 : i32
    %c0_i32_0 = arith.constant 0 : i32
    return %arg0, %c0_i32 : i32, i32
  }
  func.func @transform_1(%arg0: i32) -> (i32, i32) {
    %c0_i32 = arith.constant 0 : i32
    %c0_i32_0 = arith.constant 0 : i32
    return %arg0, %c0_i32 : i32, i32
  }
  func.func @transform_2(%arg0: i32) -> (i32, i32) {
    %c0_i32 = arith.constant 0 : i32
    %c0_i32_0 = arith.constant 0 : i32
    %c0_i32_1 = arith.constant 0 : i32
    return %c0_i32, %c0_i32_0 : i32, i32
  }
  func.func @transform_3(%arg0: i32) -> (i32, i32) {
    %c0_i32 = arith.constant 0 : i32
    %c0_i32_0 = arith.constant 0 : i32
    return %arg0, %c0_i32 : i32, i32
  }
}

</mosaic_0001>

<llo_original>
// kernel: pcont_forward.1
$region0: #{pcont_forward.1}
  #allocation0 [shape = 'u32[]', space=smem, size = 0x4, offset = 0x4, fixed_abs, tag = 'smem constant byte address 0x4 - core index']
  #allocation1 [shape = 'u32[144,128]{1,0:T(1,128)}', space=vmem, size = 0x12000, scoped, tag = 'internal scratch']
  %s0 = inlined_call_operand.vmem [shape: bf16[128,32], index: 0, kind: input, shape index: {}]
  %s1 = inlined_call_operand.vmem [shape: bf16[128,16], index: 1, kind: input, shape index: {}]
  %s2 = inlined_call_operand.vmem [shape: bf16[528,128], index: 2, kind: input, shape index: {}]
  %s3 = inlined_call_operand.vmem [shape: f32[1,128], index: 3, kind: output, shape index: {}]
  %s4 = sld [smem:[#allocation0]]
  $region22: #{pcont_forward.1} parent=0
    _
  %s6 = ssub.s32 1, %s4
  %s7 = scalar_select 0, %s6, %s4
  // Predicated region
  $region2: #{pcont_forward.1} parent=0 // pred_check
    _
  $region3: #{pcont_forward.1} parent=0 // pred_check_branch
    %9 = sbr.rel (0) target = $region5
  $region4: #{pcont_forward.1} parent=0 // pred_region
    _
  $region5: #{pcont_forward.1} parent=0 // pred_fallthru
    _
  // Predicated region
  $region6: #{pcont_forward.1} parent=0 // pred_check
    _
  $region7: #{pcont_forward.1} parent=0 // pred_check_branch
    %11 = sbr.rel (0) target = $region9
  $region8: #{pcont_forward.1} parent=0 // pred_region
    _
  $region9: #{pcont_forward.1} parent=0 // pred_fallthru
    _
  // Predicated region
  $region10: #{pcont_forward.1} parent=0 // pred_check
    _
  $region11: #{pcont_forward.1} parent=0 // pred_check_branch
    %13 = sbr.rel (0) target = $region13
  $region12: #{pcont_forward.1} parent=0 // pred_region
    _
  $region13: #{pcont_forward.1} parent=0 // pred_fallthru
    _
  %v15 = vld [vmem:[%s2 + $0x100] sm:$0xf]
  %v16 = vunpack.c.l.bf16 %v15
  %v17 = vld [vmem:[%s2] sm:$0xf]
  %v18 = vld [vmem:[%s2 + $0x4] sm:$0xf]
  %v19 = vld [vmem:[%s2 + $0x8] sm:$0xf]
  %v20 = vld [vmem:[%s2 + $0xc] sm:$0xf]
  %v21 = vld [vmem:[%s0] sm:$0xf]
  %v22 = vld [vmem:[%s0 + $0x4] sm:$0xf]
  %v23 = vld [vmem:[%s0 + $0x8] sm:$0xf]
  %v24 = vld [vmem:[%s0 + $0xc] sm:$0xf]
  %v25 = vld [vmem:[%s0 + $0x10] sm:$0xf]
  %v26 = vld [vmem:[%s0 + $0x14] sm:$0xf]
  %v27 = vld [vmem:[%s0 + $0x18] sm:$0xf]
  %v28 = vld [vmem:[%s0 + $0x1c] sm:$0xf]
  %v29 = vld [vmem:[%s0 + $0x20] sm:$0xf]
  %v30 = vld [vmem:[%s0 + $0x24] sm:$0xf]
  %v31 = vld [vmem:[%s0 + $0x28] sm:$0xf]
  %v32 = vld [vmem:[%s0 + $0x2c] sm:$0xf]
  %v33 = vld [vmem:[%s0 + $0x30] sm:$0xf]
  %v34 = vld [vmem:[%s0 + $0x34] sm:$0xf]
  %v35 = vld [vmem:[%s0 + $0x38] sm:$0xf]
  %v36 = vld [vmem:[%s0 + $0x3c] sm:$0xf]
  %v37 = vld [vmem:[%s2 + $0x10] sm:$0xf]
  %v38 = vld [vmem:[%s2 + $0x14] sm:$0xf]
  %v39 = vld [vmem:[%s1] sm:$0xf]
  %v40 = vld [vmem:[%s1 + $0x4] sm:$0xf]
  %v41 = vld [vmem:[%s1 + $0x8] sm:$0xf]
  %v42 = vld [vmem:[%s1 + $0xc] sm:$0xf]
  %v43 = vld [vmem:[%s1 + $0x10] sm:$0xf]
  %v44 = vld [vmem:[%s1 + $0x14] sm:$0xf]
  %v45 = vld [vmem:[%s1 + $0x18] sm:$0xf]
  %v46 = vld [vmem:[%s1 + $0x1c] sm:$0xf]
  %v47 = vld [vmem:[%s1 + $0x20] sm:$0xf]
  %v48 = vld [vmem:[%s1 + $0x24] sm:$0xf]
  %v49 = vld [vmem:[%s1 + $0x28] sm:$0xf]
  %v50 = vld [vmem:[%s1 + $0x2c] sm:$0xf]
  %v51 = vld [vmem:[%s1 + $0x30] sm:$0xf]
  %v52 = vld [vmem:[%s1 + $0x34] sm:$0xf]
  %v53 = vld [vmem:[%s1 + $0x38] sm:$0xf]
  %v54 = vld [vmem:[%s1 + $0x3c] sm:$0xf]
  %v71 = vunpack.c.l.b16 %v39
  %v72 = vunpack.c.l.b16 %v40
  %v73 = vunpack.c.l.b16 %v41
  %v74 = vunpack.c.l.b16 %v42
  %v75 = vunpack.c.l.b16 %v43
  %v76 = vunpack.c.l.b16 %v44
  %v77 = vunpack.c.l.b16 %v45
  %v78 = vunpack.c.l.b16 %v46
  %v79 = vunpack.c.l.b16 %v47
  %v80 = vunpack.c.l.b16 %v48
  %v81 = vunpack.c.l.b16 %v49
  %v82 = vunpack.c.l.b16 %v50
  %v83 = vunpack.c.l.b16 %v51
  %v84 = vunpack.c.l.b16 %v52
  %v85 = vunpack.c.l.b16 %v53
  %v86 = vunpack.c.l.b16 %v54
  %v87 = vpack.c.b16 %v72, %v71
  %v88 = vpack.c.b16 %v74, %v73
  %v89 = vpack.c.b16 %v76, %v75
  %v90 = vpack.c.b16 %v78, %v77
  %v91 = vpack.c.b16 %v80, %v79
  %v92 = vpack.c.b16 %v82, %v81
  %v93 = vpack.c.b16 %v84, %v83
  %v94 = vpack.c.b16 %v86, %v85
  %v97 = vunpack.c.l.b16 %v37
  %v98 = vunpack.c.l.b16 %v38
  %v99 = vpack.c.b16 %v98, %v97
  %vm101 = vcmask 130048
  %v103 = vsel %vm101, %v87, 0
  %v106 = vsel %vm101, %v88, 0
  %v109 = vsel %vm101, %v89, 0
  %v112 = vsel %vm101, %v90, 0
  %v115 = vsel %vm101, %v91, 0
  %v118 = vsel %vm101, %v92, 0
  %v121 = vsel %vm101, %v93, 0
  %v124 = vsel %vm101, %v94, 0
  %126 = vmatprep.subr.bf16.mxu0 0
  %127 = vmatpush1.bf16.msra.mxu0 %v99
  %128 = vmatprep.subr.bf16.mxu0 0
  %129 = vmatpush1.bf16.msra.mxu0 0
  %130 = vmatprep.subr.bf16.mxu0 0
  %131 = vmatpush1.bf16.msra.mxu0 0
  %132 = vmatprep.subr.bf16.mxu0 0
  %133 = vmatpush1.bf16.msra.mxu0 0
  %134 = vmatprep.subr.bf16.mxu0 0
  %135 = vmatpush1.bf16.msra.mxu0 0
  %136 = vmatprep.subr.bf16.mxu0 0
  %137 = vmatpush1.bf16.msra.mxu0 0
  %138 = vmatprep.subr.bf16.mxu0 0
  %139 = vmatpush1.bf16.msra.mxu0 0
  %140 = vmatprep.subr.bf16.mxu0 0
  %141 = vmatpush1.bf16.msra.mxu0 0
  %142 = vmatprep.subr.bf16.mxu0 0
  %143 = vmatpush1.bf16.msra.mxu0 0
  %144 = vmatprep.subr.bf16.mxu0 0
  %145 = vmatpush1.bf16.msra.mxu0 0
  %146 = vmatprep.subr.bf16.mxu0 0
  %147 = vmatpush1.bf16.msra.mxu0 0
  %148 = vmatprep.subr.bf16.mxu0 0
  %149 = vmatpush1.bf16.msra.mxu0 0
  %150 = vmatprep.subr.bf16.mxu0 0
  %151 = vmatpush1.bf16.msra.mxu0 0
  %152 = vmatprep.subr.bf16.mxu0 0
  %153 = vmatpush1.bf16.msra.mxu0 0
  %154 = vmatprep.subr.bf16.mxu0 0
  %155 = vmatpush1.bf16.msra.mxu0 0
  %156 = vmatprep.subr.bf16.mxu0 0
  %157 = vmatpush1.bf16.msra.mxu0 0
  %158 = vmatprep.mubr.bf16.mxu0 0
  %159 = vmatmul.mubr.bf16.gmra.mrb[0].mxu0 %v103
  %v160 = vpop.f32.mrb[0].mxu0
  %v161 = vadd.f32 0.0, %v160
  %v162 = vpop.f32.mrb[0].mxu0
  %v163 = vpop.f32.mrb[0].mxu0
  %v164 = vadd.f32 0.0, %v163
  %v165 = vpop.f32.mrb[0].mxu0
  %166 = vmatprep.mubr.bf16.mxu0 0
  %167 = vmatmul.mubr.bf16.gmra.mrb[0].mxu0 %v106
  %v168 = vpop.f32.mrb[0].mxu0
  %v169 = vadd.f32 0.0, %v168
  %v170 = vpop.f32.mrb[0].mxu0
  %v171 = vpop.f32.mrb[0].mxu0
  %v172 = vadd.f32 0.0, %v171
  %v173 = vpop.f32.mrb[0].mxu0
  %174 = vmatprep.mubr.bf16.mxu0 0
  %175 = vmatmul.mubr.bf16.gmra.mrb[0].mxu0 %v109
  %v176 = vpop.f32.mrb[0].mxu0
  %v177 = vadd.f32 0.0, %v176
  %v178 = vpop.f32.mrb[0].mxu0
  %v179 = vpop.f32.mrb[0].mxu0
  %v180 = vadd.f32 0.0, %v179
  %v181 = vpop.f32.mrb[0].mxu0
  %182 = vmatprep.mubr.bf16.mxu0 0
  %183 = vmatmul.mubr.bf16.gmra.mrb[0].mxu0 %v112
  %v184 = vpop.f32.mrb[0].mxu0
  %v185 = vadd.f32 0.0, %v184
  %v186 = vpop.f32.mrb[0].mxu0
  %v187 = vpop.f32.mrb[0].mxu0
  %v188 = vadd.f32 0.0, %v187
  %v189 = vpop.f32.mrb[0].mxu0
  %190 = vmatprep.mubr.bf16.mxu0 0
  %191 = vmatmul.mubr.bf16.gmra.mrb[0].mxu0 %v115
  %v192 = vpop.f32.mrb[0].mxu0
  %v193 = vadd.f32 0.0, %v192
  %v194 = vpop.f32.mrb[0].mxu0
  %v195 = vpop.f32.mrb[0].mxu0
  %v196 = vadd.f32 0.0, %v195
  %v197 = vpop.f32.mrb[0].mxu0
  %198 = vmatprep.mubr.bf16.mxu0 0
  %199 = vmatmul.mubr.bf16.gmra.mrb[0].mxu0 %v118
  %v200 = vpop.f32.mrb[0].mxu0
  %v201 = vadd.f32 0.0, %v200
  %v202 = vpop.f32.mrb[0].mxu0
  %v203 = vpop.f32.mrb[0].mxu0
  %v204 = vadd.f32 0.0, %v203
  %v205 = vpop.f32.mrb[0].mxu0
  %206 = vmatprep.mubr.bf16.mxu0 0
  %207 = vmatmul.mubr.bf16.gmra.mrb[0].mxu0 %v121
  %v208 = vpop.f32.mrb[0].mxu0
  %v209 = vadd.f32 0.0, %v208
  %v210 = vpop.f32.mrb[0].mxu0
  %v211 = vpop.f32.mrb[0].mxu0
  %v212 = vadd.f32 0.0, %v211
  %v213 = vpop.f32.mrb[0].mxu0
  %214 = vmatprep.mubr.bf16.mxu0 0
  %215 = vmatmul.mubr.bf16.gmra.mrb[0].mxu0 %v124
  %v216 = vpop.f32.mrb[0].mxu0
  %v217 = vadd.f32 0.0, %v216
  %v218 = vpop.f32.mrb[0].mxu0
  %v219 = vpop.f32.mrb[0].mxu0
  %v220 = vadd.f32 0.0, %v219
  %v221 = vpop.f32.mrb[0].mxu0
  %222 = vdwg.mxu0
  %v239 = vunpack.c.l.b16 %v21
  %v240 = vunpack.c.l.b16 %v22
  %v241 = vunpack.c.l.b16 %v23
  %v242 = vunpack.c.l.b16 %v24
  %v243 = vunpack.c.l.b16 %v25
  %v244 = vunpack.c.l.b16 %v26
  %v245 = vunpack.c.l.b16 %v27
  %v246 = vunpack.c.l.b16 %v28
  %v247 = vunpack.c.l.b16 %v29
  %v248 = vunpack.c.l.b16 %v30
  %v249 = vunpack.c.l.b16 %v31
  %v250 = vunpack.c.l.b16 %v32
  %v251 = vunpack.c.l.b16 %v33
  %v252 = vunpack.c.l.b16 %v34
  %v253 = vunpack.c.l.b16 %v35
  %v254 = vunpack.c.l.b16 %v36
  %v255 = vpack.c.b16 %v240, %v239
  %v256 = vpack.c.b16 %v242, %v241
  %v257 = vpack.c.b16 %v244, %v243
  %v258 = vpack.c.b16 %v246, %v245
  %v259 = vpack.c.b16 %v248, %v247
  %v260 = vpack.c.b16 %v250, %v249
  %v261 = vpack.c.b16 %v252, %v251
  %v262 = vpack.c.b16 %v254, %v253
  %v267 = vunpack.c.l.b16 %v17
  %v268 = vunpack.c.l.b16 %v18
  %v269 = vunpack.c.l.b16 %v19
  %v270 = vunpack.c.l.b16 %v20
  %v271 = vpack.c.b16 %v268, %v267
  %v272 = vpack.c.b16 %v270, %v269
  %vm275 = vcmask 261120
  %v277 = vsel %vm275, %v255, 0
  %v280 = vsel %vm275, %v256, 0
  %v283 = vsel %vm275, %v257, 0
  %v286 = vsel %vm275, %v258, 0
  %v289 = vsel %vm275, %v259, 0
  %v292 = vsel %vm275, %v260, 0
  %v295 = vsel %vm275, %v261, 0
  %v298 = vsel %vm275, %v262, 0
  %300 = vmatprep.subr.bf16.mxu0 0
  %301 = vmatpush1.bf16.msra.mxu0 %v271
  %302 = vmatprep.subr.bf16.mxu0 0
  %303 = vmatpush1.bf16.msra.mxu0 %v272
  %304 = vmatprep.subr.bf16.mxu0 0
  %305 = vmatpush1.bf16.msra.mxu0 0
  %306 = vmatprep.subr.bf16.mxu0 0
  %307 = vmatpush1.bf16.msra.mxu0 0
  %308 = vmatprep.subr.bf16.mxu0 0
  %309 = vmatpush1.bf16.msra.mxu0 0
  %310 = vmatprep.subr.bf16.mxu0 0
  %311 = vmatpush1.bf16.msra.mxu0 0
  %312 = vmatprep.subr.bf16.mxu0 0
  %313 = vmatpush1.bf16.msra.mxu0 0
  %314 = vmatprep.subr.bf16.mxu0 0
  %315 = vmatpush1.bf16.msra.mxu0 0
  %316 = vmatprep.subr.bf16.mxu0 0
  %317 = vmatpush1.bf16.msra.mxu0 0
  %318 = vmatprep.subr.bf16.mxu0 0
  %319 = vmatpush1.bf16.msra.mxu0 0
  %320 = vmatprep.subr.bf16.mxu0 0
  %321 = vmatpush1.bf16.msra.mxu0 0
  %322 = vmatprep.subr.bf16.mxu0 0
  %323 = vmatpush1.bf16.msra.mxu0 0
  %324 = vmatprep.subr.bf16.mxu0 0
  %325 = vmatpush1.bf16.msra.mxu0 0
  %326 = vmatprep.subr.bf16.mxu0 0
  %327 = vmatpush1.bf16.msra.mxu0 0
  %328 = vmatprep.subr.bf16.mxu0 0
  %329 = vmatpush1.bf16.msra.mxu0 0
  %330 = vmatprep.subr.bf16.mxu0 0
  %331 = vmatpush1.bf16.msra.mxu0 0
  %332 = vmatprep.mubr.bf16.mxu0 0
  %333 = vmatmul.mubr.bf16.gmra.mrb[0].mxu0 %v277
  %v334 = vpop.f32.mrb[0].mxu0
  %v335 = vadd.f32 %v161, %v334
  %v336 = vpop.f32.mrb[0].mxu0
  %v337 = vpop.f32.mrb[0].mxu0
  %v338 = vadd.f32 %v164, %v337
  %v339 = vpop.f32.mrb[0].mxu0
  %340 = vmatprep.mubr.bf16.mxu0 0
  %341 = vmatmul.mubr.bf16.gmra.mrb[0].mxu0 %v280
  %v342 = vpop.f32.mrb[0].mxu0
  %v343 = vadd.f32 %v169, %v342
  %v344 = vpop.f32.mrb[0].mxu0
  %v345 = vpop.f32.mrb[0].mxu0
  %v346 = vadd.f32 %v172, %v345
  %v347 = vpop.f32.mrb[0].mxu0
  %348 = vmatprep.mubr.bf16.mxu0 0
  %349 = vmatmul.mubr.bf16.gmra.mrb[0].mxu0 %v283
  %v350 = vpop.f32.mrb[0].mxu0
  %v351 = vadd.f32 %v177, %v350
  %v352 = vpop.f32.mrb[0].mxu0
  %v353 = vpop.f32.mrb[0].mxu0
  %v354 = vadd.f32 %v180, %v353
  %v355 = vpop.f32.mrb[0].mxu0
  %356 = vmatprep.mubr.bf16.mxu0 0
  %357 = vmatmul.mubr.bf16.gmra.mrb[0].mxu0 %v286
  %v358 = vpop.f32.mrb[0].mxu0
  %v359 = vadd.f32 %v185, %v358
  %v360 = vpop.f32.mrb[0].mxu0
  %v361 = vpop.f32.mrb[0].mxu0
  %v362 = vadd.f32 %v188, %v361
  %v363 = vpop.f32.mrb[0].mxu0
  %364 = vmatprep.mubr.bf16.mxu0 0
  %365 = vmatmul.mubr.bf16.gmra.mrb[0].mxu0 %v289
  %v366 = vpop.f32.mrb[0].mxu0
  %v367 = vadd.f32 %v193, %v366
  %v368 = vpop.f32.mrb[0].mxu0
  %v369 = vpop.f32.mrb[0].mxu0
  %v370 = vadd.f32 %v196, %v369
  %v371 = vpop.f32.mrb[0].mxu0
  %372 = vmatprep.mubr.bf16.mxu0 0
  %373 = vmatmul.mubr.bf16.gmra.mrb[0].mxu0 %v292
  %v374 = vpop.f32.mrb[0].mxu0
  %v375 = vadd.f32 %v201, %v374
  %v376 = vpop.f32.mrb[0].mxu0
  %v377 = vpop.f32.mrb[0].mxu0
  %v378 = vadd.f32 %v204, %v377
  %v379 = vpop.f32.mrb[0].mxu0
  %380 = vmatprep.mubr.bf16.mxu0 0
  %381 = vmatmul.mubr.bf16.gmra.mrb[0].mxu0 %v295
  %v382 = vpop.f32.mrb[0].mxu0
  %v383 = vadd.f32 %v209, %v382
  %v384 = vpop.f32.mrb[0].mxu0
  %v385 = vpop.f32.mrb[0].mxu0
  %v386 = vadd.f32 %v212, %v385
  %v387 = vpop.f32.mrb[0].mxu0
  %388 = vmatprep.mubr.bf16.mxu0 0
  %389 = vmatmul.mubr.bf16.gmra.mrb[0].mxu0 %v298
  %v390 = vpop.f32.mrb[0].mxu0
  %v391 = vadd.f32 %v217, %v390
  %v392 = vpop.f32.mrb[0].mxu0
  %v393 = vpop.f32.mrb[0].mxu0
  %v394 = vadd.f32 %v220, %v393
  %v395 = vpop.f32.mrb[0].mxu0
  %396 = vdwg.mxu0
  %v397 = vlaneseq
  %v398 = vshrl.u32 %v397, 7
  %v399 = vsub.s32 0, %v398
  %v400 = vrot.slane %v16, %v399
  %v401 = vadd.f32 %v335, %v400
  %v402 = vadd.f32 %v338, %v400
  %v403 = vadd.f32 %v343, %v400
  %v404 = vadd.f32 %v346, %v400
  %v405 = vadd.f32 %v351, %v400
  %v406 = vadd.f32 %v354, %v400
  %v407 = vadd.f32 %v359, %v400
  %v408 = vadd.f32 %v362, %v400
  %v409 = vadd.f32 %v367, %v400
  %v410 = vadd.f32 %v370, %v400
  %v411 = vadd.f32 %v375, %v400
  %v412 = vadd.f32 %v378, %v400
  %v413 = vadd.f32 %v383, %v400
  %v414 = vadd.f32 %v386, %v400
  %v415 = vadd.f32 %v391, %v400
  %v416 = vadd.f32 %v394, %v400
  %v417 = vmax.f32 %v401, 0.0
  %v418 = vmax.f32 %v402, 0.0
  %v419 = vmax.f32 %v403, 0.0
  %v420 = vmax.f32 %v404, 0.0
  %v421 = vmax.f32 %v405, 0.0
  %v422 = vmax.f32 %v406, 0.0
  %v423 = vmax.f32 %v407, 0.0
  %v424 = vmax.f32 %v408, 0.0
  %v425 = vmax.f32 %v409, 0.0
  %v426 = vmax.f32 %v410, 0.0
  %v427 = vmax.f32 %v411, 0.0
  %v428 = vmax.f32 %v412, 0.0
  %v429 = vmax.f32 %v413, 0.0
  %v430 = vmax.f32 %v414, 0.0
  %v431 = vmax.f32 %v415, 0.0
  %v432 = vmax.f32 %v416, 0.0
  %v433 = vld [vmem:[%s2 + $0x40] sm:$0xf]
  %v434 = vld [vmem:[%s2 + $0x44] sm:$0xf]
  %v435 = vld [vmem:[%s2 + $0x48] sm:$0xf]
  %v436 = vld [vmem:[%s2 + $0x4c] sm:$0xf]
  %v437 = vld [vmem:[%s2 + $0x50] sm:$0xf]
  %v438 = vld [vmem:[%s2 + $0x54] sm:$0xf]
  %v439 = vld [vmem:[%s2 + $0x58] sm:$0xf]
  %v440 = vld [vmem:[%s2 + $0x5c] sm:$0xf]
  %v441 = vld [vmem:[%s2 + $0x60] sm:$0xf]
  %v442 = vld [vmem:[%s2 + $0x64] sm:$0xf]
  %v443 = vld [vmem:[%s2 + $0x68] sm:$0xf]
  %v444 = vld [vmem:[%s2 + $0x6c] sm:$0xf]
  %v445 = vld [vmem:[%s2 + $0x70] sm:$0xf]
  %v446 = vld [vmem:[%s2 + $0x74] sm:$0xf]
  %v447 = vld [vmem:[%s2 + $0x78] sm:$0xf]
  %v448 = vld [vmem:[%s2 + $0x7c] sm:$0xf]
  %v449 = vpack.c.bf16 %v418, %v417
  %v450 = vpack.c.bf16 %v420, %v419
  %v451 = vpack.c.bf16 %v422, %v421
  %v452 = vpack.c.bf16 %v424, %v423
  %v453 = vpack.c.bf16 %v426, %v425
  %v454 = vpack.c.bf16 %v428, %v427
  %v455 = vpack.c.bf16 %v430, %v429
  %v456 = vpack.c.bf16 %v432, %v431
  %v457 = vlaneseq
  %v458 = vshrl.u32 %v457, 7
  %v459 = vsub.s32 1, %v458
  %v460 = vrot.slane %v16, %v459
  %v477 = vunpack.c.l.b16 %v433
  %v478 = vunpack.c.l.b16 %v434
  %v479 = vunpack.c.l.b16 %v435
  %v480 = vunpack.c.l.b16 %v436
  %v481 = vunpack.c.l.b16 %v437
  %v482 = vunpack.c.l.b16 %v438
  %v483 = vunpack.c.l.b16 %v439
  %v484 = vunpack.c.l.b16 %v440
  %v485 = vunpack.c.l.b16 %v441
  %v486 = vunpack.c.l.b16 %v442
  %v487 = vunpack.c.l.b16 %v443
  %v488 = vunpack.c.l.b16 %v444
  %v489 = vunpack.c.l.b16 %v445
  %v490 = vunpack.c.l.b16 %v446
  %v491 = vunpack.c.l.b16 %v447
  %v492 = vunpack.c.l.b16 %v448
  %v493 = vpack.c.b16 %v478, %v477
  %v494 = vpack.c.b16 %v480, %v479
  %v495 = vpack.c.b16 %v482, %v481
  %v496 = vpack.c.b16 %v484, %v483
  %v497 = vpack.c.b16 %v486, %v485
  %v498 = vpack.c.b16 %v488, %v487
  %v499 = vpack.c.b16 %v490, %v489
  %v500 = vpack.c.b16 %v492, %v491
  %509 = vmatprep.subr.bf16.mxu0 0
  %510 = vmatpush1.bf16.msra.mxu0 %v493
  %511 = vmatprep.subr.bf16.mxu0 0
  %512 = vmatpush1.bf16.msra.mxu0 %v494
  %513 = vmatprep.subr.bf16.mxu0 0
  %514 = vmatpush1.bf16.msra.mxu0 %v495
  %515 = vmatprep.subr.bf16.mxu0 0
  %516 = vmatpush1.bf16.msra.mxu0 %v496
  %517 = vmatprep.subr.bf16.mxu0 0
  %518 = vmatpush1.bf16.msra.mxu0 %v497
  %519 = vmatprep.subr.bf16.mxu0 0
  %520 = vmatpush1.bf16.msra.mxu0 %v498
  %521 = vmatprep.subr.bf16.mxu0 0
  %522 = vmatpush1.bf16.msra.mxu0 %v499
  %523 = vmatprep.subr.bf16.mxu0 0
  %524 = vmatpush1.bf16.msra.mxu0 %v500
  %525 = vmatprep.subr.bf16.mxu0 0
  %526 = vmatpush1.bf16.msra.mxu0 0
  %527 = vmatprep.subr.bf16.mxu0 0
  %528 = vmatpush1.bf16.msra.mxu0 0
  %529 = vmatprep.subr.bf16.mxu0 0
  %530 = vmatpush1.bf16.msra.mxu0 0
  %531 = vmatprep.subr.bf16.mxu0 0
  %532 = vmatpush1.bf16.msra.mxu0 0
  %533 = vmatprep.subr.bf16.mxu0 0
  %534 = vmatpush1.bf16.msra.mxu0 0
  %535 = vmatprep.subr.bf16.mxu0 0
  %536 = vmatpush1.bf16.msra.mxu0 0
  %537 = vmatprep.subr.bf16.mxu0 0
  %538 = vmatpush1.bf16.msra.mxu0 0
  %539 = vmatprep.subr.bf16.mxu0 0
  %540 = vmatpush1.bf16.msra.mxu0 0
  %541 = vmatprep.mubr.bf16.mxu0 0
  %542 = vmatmul.mubr.bf16.gmra.mrb[0].mxu0 %v449
  %v543 = vpop.f32.mrb[0].mxu0
  %v544 = vadd.f32 %v460, %v543
  %v545 = vpop.f32.mrb[0].mxu0
  %v546 = vpop.f32.mrb[0].mxu0
  %v547 = vadd.f32 %v460, %v546
  %v548 = vpop.f32.mrb[0].mxu0
  %549 = vmatprep.mubr.bf16.mxu0 0
  %550 = vmatmul.mubr.bf16.gmra.mrb[0].mxu0 %v450
  %v551 = vpop.f32.mrb[0].mxu0
  %v552 = vadd.f32 %v460, %v551
  %v553 = vpop.f32.mrb[0].mxu0
  %v554 = vpop.f32.mrb[0].mxu0
  %v555 = vadd.f32 %v460, %v554
  %v556 = vpop.f32.mrb[0].mxu0
  %557 = vmatprep.mubr.bf16.mxu0 0
  %558 = vmatmul.mubr.bf16.gmra.mrb[0].mxu0 %v451
  %v559 = vpop.f32.mrb[0].mxu0
  %v560 = vadd.f32 %v460, %v559
  %v561 = vpop.f32.mrb[0].mxu0
  %v562 = vpop.f32.mrb[0].mxu0
  %v563 = vadd.f32 %v460, %v562
  %v564 = vpop.f32.mrb[0].mxu0
  %565 = vmatprep.mubr.bf16.mxu0 0
  %566 = vmatmul.mubr.bf16.gmra.mrb[0].mxu0 %v452
  %v567 = vpop.f32.mrb[0].mxu0
  %v568 = vadd.f32 %v460, %v567
  %v569 = vpop.f32.mrb[0].mxu0
  %v570 = vpop.f32.mrb[0].mxu0
  %v571 = vadd.f32 %v460, %v570
  %v572 = vpop.f32.mrb[0].mxu0
  %573 = vmatprep.mubr.bf16.mxu0 0
  %574 = vmatmul.mubr.bf16.gmra.mrb[0].mxu0 %v453
  %v575 = vpop.f32.mrb[0].mxu0
  %v576 = vadd.f32 %v460, %v575
  %v577 = vpop.f32.mrb[0].mxu0
  %v578 = vpop.f32.mrb[0].mxu0
  %v579 = vadd.f32 %v460, %v578
  %v580 = vpop.f32.mrb[0].mxu0
  %581 = vmatprep.mubr.bf16.mxu0 0
  %582 = vmatmul.mubr.bf16.gmra.mrb[0].mxu0 %v454
  %v583 = vpop.f32.mrb[0].mxu0
  %v584 = vadd.f32 %v460, %v583
  %v585 = vpop.f32.mrb[0].mxu0
  %v586 = vpop.f32.mrb[0].mxu0
  %v587 = vadd.f32 %v460, %v586
  %v588 = vpop.f32.mrb[0].mxu0
  %589 = vmatprep.mubr.bf16.mxu0 0
  %590 = vmatmul.mubr.bf16.gmra.mrb[0].mxu0 %v455
  %v591 = vpop.f32.mrb[0].mxu0
  %v592 = vadd.f32 %v460, %v591
  %v593 = vpop.f32.mrb[0].mxu0
  %v594 = vpop.f32.mrb[0].mxu0
  %v595 = vadd.f32 %v460, %v594
  %v596 = vpop.f32.mrb[0].mxu0
  %597 = vmatprep.mubr.bf16.mxu0 0
  %598 = vmatmul.mubr.bf16.gmra.mrb[0].mxu0 %v456
  %v599 = vpop.f32.mrb[0].mxu0
  %v600 = vadd.f32 %v460, %v599
  %v601 = vpop.f32.mrb[0].mxu0
  %v602 = vpop.f32.mrb[0].mxu0
  %v603 = vadd.f32 %v460, %v602
  %v604 = vpop.f32.mrb[0].mxu0
  %605 = vdwg.mxu0
  %v606 = vmax.f32 %v544, 0.0
  %v607 = vmax.f32 %v547, 0.0
  %v608 = vmax.f32 %v552, 0.0
  %v609 = vmax.f32 %v555, 0.0
  %v610 = vmax.f32 %v560, 0.0
  %v611 = vmax.f32 %v563, 0.0
  %v612 = vmax.f32 %v568, 0.0
  %v613 = vmax.f32 %v571, 0.0
  %v614 = vmax.f32 %v576, 0.0
  %v615 = vmax.f32 %v579, 0.0
  %v616 = vmax.f32 %v584, 0.0
  %v617 = vmax.f32 %v587, 0.0
  %v618 = vmax.f32 %v592, 0.0
  %v619 = vmax.f32 %v595, 0.0
  %v620 = vmax.f32 %v600, 0.0
  %v621 = vmax.f32 %v603, 0.0
  %v622 = vld [vmem:[%s2 + $0x80] sm:$0xf]
  %v623 = vld [vmem:[%s2 + $0x84] sm:$0xf]
  %v624 = vld [vmem:[%s2 + $0x88] sm:$0xf]
  %v625 = vld [vmem:[%s2 + $0x8c] sm:$0xf]
  %v626 = vld [vmem:[%s2 + $0x90] sm:$0xf]
  %v627 = vld [vmem:[%s2 + $0x94] sm:$0xf]
  %v628 = vld [vmem:[%s2 + $0x98] sm:$0xf]
  %v629 = vld [vmem:[%s2 + $0x9c] sm:$0xf]
  %v630 = vld [vmem:[%s2 + $0xa0] sm:$0xf]
  %v631 = vld [vmem:[%s2 + $0xa4] sm:$0xf]
  %v632 = vld [vmem:[%s2 + $0xa8] sm:$0xf]
  %v633 = vld [vmem:[%s2 + $0xac] sm:$0xf]
  %v634 = vld [vmem:[%s2 + $0xb0] sm:$0xf]
  %v635 = vld [vmem:[%s2 + $0xb4] sm:$0xf]
  %v636 = vld [vmem:[%s2 + $0xb8] sm:$0xf]
  %v637 = vld [vmem:[%s2 + $0xbc] sm:$0xf]
  %v638 = vpack.c.bf16 %v607, %v606
  %v639 = vpack.c.bf16 %v609, %v608
  %v640 = vpack.c.bf16 %v611, %v610
  %v641 = vpack.c.bf16 %v613, %v612
  %v642 = vpack.c.bf16 %v615, %v614
  %v643 = vpack.c.bf16 %v617, %v616
  %v644 = vpack.c.bf16 %v619, %v618
  %v645 = vpack.c.bf16 %v621, %v620
  %v646 = vlaneseq
  %v647 = vshrl.u32 %v646, 7
  %v648 = vsub.s32 2, %v647
  %v649 = vrot.slane %v16, %v648
  %v666 = vunpack.c.l.b16 %v622
  %v667 = vunpack.c.l.b16 %v623
  %v668 = vunpack.c.l.b16 %v624
  %v669 = vunpack.c.l.b16 %v625
  %v670 = vunpack.c.l.b16 %v626
  %v671 = vunpack.c.l.b16 %v627
  %v672 = vunpack.c.l.b16 %v628
  %v673 = vunpack.c.l.b16 %v629
  %v674 = vunpack.c.l.b16 %v630
  %v675 = vunpack.c.l.b16 %v631
  %v676 = vunpack.c.l.b16 %v632
  %v677 = vunpack.c.l.b16 %v633
  %v678 = vunpack.c.l.b16 %v634
  %v679 = vunpack.c.l.b16 %v635
  %v680 = vunpack.c.l.b16 %v636
  %v681 = vunpack.c.l.b16 %v637
  %v682 = vpack.c.b16 %v667, %v666
  %v683 = vpack.c.b16 %v669, %v668
  %v684 = vpack.c.b16 %v671, %v670
  %v685 = vpack.c.b16 %v673, %v672
  %v686 = vpack.c.b16 %v675, %v674
  %v687 = vpack.c.b16 %v677, %v676
  %v688 = vpack.c.b16 %v679, %v678
  %v689 = vpack.c.b16 %v681, %v680
  %698 = vmatprep.subr.bf16.mxu0 0
  %699 = vmatpush1.bf16.msra.mxu0 %v682
  %700 = vmatprep.subr.bf16.mxu0 0
  %701 = vmatpush1.bf16.msra.mxu0 %v683
  %702 = vmatprep.subr.bf16.mxu0 0
  %703 = vmatpush1.bf16.msra.mxu0 %v684
  %704 = vmatprep.subr.bf16.mxu0 0
  %705 = vmatpush1.bf16.msra.mxu0 %v685
  %706 = vmatprep.subr.bf16.mxu0 0
  %707 = vmatpush1.bf16.msra.mxu0 %v686
  %708 = vmatprep.subr.bf16.mxu0 0
  %709 = vmatpush1.bf16.msra.mxu0 %v687
  %710 = vmatprep.subr.bf16.mxu0 0
  %711 = vmatpush1.bf16.msra.mxu0 %v688
  %712 = vmatprep.subr.bf16.mxu0 0
  %713 = vmatpush1.bf16.msra.mxu0 %v689
  %714 = vmatprep.subr.bf16.mxu0 0
  %715 = vmatpush1.bf16.msra.mxu0 0
  %716 = vmatprep.subr.bf16.mxu0 0
  %717 = vmatpush1.bf16.msra.mxu0 0
  %718 = vmatprep.subr.bf16.mxu0 0
  %719 = vmatpush1.bf16.msra.mxu0 0
  %720 = vmatprep.subr.bf16.mxu0 0
  %721 = vmatpush1.bf16.msra.mxu0 0
  %722 = vmatprep.subr.bf16.mxu0 0
  %723 = vmatpush1.bf16.msra.mxu0 0
  %724 = vmatprep.subr.bf16.mxu0 0
  %725 = vmatpush1.bf16.msra.mxu0 0
  %726 = vmatprep.subr.bf16.mxu0 0
  %727 = vmatpush1.bf16.msra.mxu0 0
  %728 = vmatprep.subr.bf16.mxu0 0
  %729 = vmatpush1.bf16.msra.mxu0 0
  %730 = vmatprep.mubr.bf16.mxu0 0
  %731 = vmatmul.mubr.bf16.gmra.mrb[0].mxu0 %v638
  %v732 = vpop.f32.mrb[0].mxu0
  %v733 = vadd.f32 %v649, %v732
  %v734 = vpop.f32.mrb[0].mxu0
  %v735 = vpop.f32.mrb[0].mxu0
  %v736 = vadd.f32 %v649, %v735
  %v737 = vpop.f32.mrb[0].mxu0
  %738 = vmatprep.mubr.bf16.mxu0 0
  %739 = vmatmul.mubr.bf16.gmra.mrb[0].mxu0 %v639
  %v740 = vpop.f32.mrb[0].mxu0
  %v741 = vadd.f32 %v649, %v740
  %v742 = vpop.f32.mrb[0].mxu0
  %v743 = vpop.f32.mrb[0].mxu0
  %v744 = vadd.f32 %v649, %v743
  %v745 = vpop.f32.mrb[0].mxu0
  %746 = vmatprep.mubr.bf16.mxu0 0
  %747 = vmatmul.mubr.bf16.gmra.mrb[0].mxu0 %v640
  %v748 = vpop.f32.mrb[0].mxu0
  %v749 = vadd.f32 %v649, %v748
  %v750 = vpop.f32.mrb[0].mxu0
  %v751 = vpop.f32.mrb[0].mxu0
  %v752 = vadd.f32 %v649, %v751
  %v753 = vpop.f32.mrb[0].mxu0
  %754 = vmatprep.mubr.bf16.mxu0 0
  %755 = vmatmul.mubr.bf16.gmra.mrb[0].mxu0 %v641
  %v756 = vpop.f32.mrb[0].mxu0
  %v757 = vadd.f32 %v649, %v756
  %v758 = vpop.f32.mrb[0].mxu0
  %v759 = vpop.f32.mrb[0].mxu0
  %v760 = vadd.f32 %v649, %v759
  %v761 = vpop.f32.mrb[0].mxu0
  %762 = vmatprep.mubr.bf16.mxu0 0
  %763 = vmatmul.mubr.bf16.gmra.mrb[0].mxu0 %v642
  %v764 = vpop.f32.mrb[0].mxu0
  %v765 = vadd.f32 %v649, %v764
  %v766 = vpop.f32.mrb[0].mxu0
  %v767 = vpop.f32.mrb[0].mxu0
  %v768 = vadd.f32 %v649, %v767
  %v769 = vpop.f32.mrb[0].mxu0
  %770 = vmatprep.mubr.bf16.mxu0 0
  %771 = vmatmul.mubr.bf16.gmra.mrb[0].mxu0 %v643
  %v772 = vpop.f32.mrb[0].mxu0
  %v773 = vadd.f32 %v649, %v772
  %v774 = vpop.f32.mrb[0].mxu0
  %v775 = vpop.f32.mrb[0].mxu0
  %v776 = vadd.f32 %v649, %v775
  %v777 = vpop.f32.mrb[0].mxu0
  %778 = vmatprep.mubr.bf16.mxu0 0
  %779 = vmatmul.mubr.bf16.gmra.mrb[0].mxu0 %v644
  %v780 = vpop.f32.mrb[0].mxu0
  %v781 = vadd.f32 %v649, %v780
  %v782 = vpop.f32.mrb[0].mxu0
  %v783 = vpop.f32.mrb[0].mxu0
  %v784 = vadd.f32 %v649, %v783
  %v785 = vpop.f32.mrb[0].mxu0
  %786 = vmatprep.mubr.bf16.mxu0 0
  %787 = vmatmul.mubr.bf16.gmra.mrb[0].mxu0 %v645
  %v788 = vpop.f32.mrb[0].mxu0
  %v789 = vadd.f32 %v649, %v788
  %v790 = vpop.f32.mrb[0].mxu0
  %v791 = vpop.f32.mrb[0].mxu0
  %v792 = vadd.f32 %v649, %v791
  %v793 = vpop.f32.mrb[0].mxu0
  %794 = vdwg.mxu0
  %v795 = vmax.f32 %v733, 0.0
  %v796 = vmax.f32 %v736, 0.0
  %v797 = vmax.f32 %v741, 0.0
  %v798 = vmax.f32 %v744, 0.0
  %v799 = vmax.f32 %v749, 0.0
  %v800 = vmax.f32 %v752, 0.0
  %v801 = vmax.f32 %v757, 0.0
  %v802 = vmax.f32 %v760, 0.0
  %v803 = vmax.f32 %v765, 0.0
  %v804 = vmax.f32 %v768, 0.0
  %v805 = vmax.f32 %v773, 0.0
  %v806 = vmax.f32 %v776, 0.0
  %v807 = vmax.f32 %v781, 0.0
  %v808 = vmax.f32 %v784, 0.0
  %v809 = vmax.f32 %v789, 0.0
  %v810 = vmax.f32 %v792, 0.0
  %v811 = vld [vmem:[%s2 + $0xc0] sm:$0xf]
  %v812 = vld [vmem:[%s2 + $0xc4] sm:$0xf]
  %813 = vxpose.xlu0.b32.start [1/16] %v795, 128
  %814 = vxpose.xlu0.b32.cont [2/16] %v796, 128
  %815 = vxpose.xlu0.b32.cont [3/16] %v797, 128
  %816 = vxpose.xlu0.b32.cont [4/16] %v798, 128
  %817 = vxpose.xlu0.b32.cont [5/16] %v799, 128
  %818 = vxpose.xlu0.b32.cont [6/16] %v800, 128
  %819 = vxpose.xlu0.b32.cont [7/16] %v801, 128
  %820 = vxpose.xlu0.b32.cont [8/16] %v802, 128
  %821 = vxpose.xlu0.b32.cont [9/16] %v803, 128
  %822 = vxpose.xlu0.b32.cont [10/16] %v804, 128
  %823 = vxpose.xlu0.b32.cont [11/16] %v805, 128
  %824 = vxpose.xlu0.b32.cont [12/16] %v806, 128
  %825 = vxpose.xlu0.b32.cont [13/16] %v807, 128
  %826 = vxpose.xlu0.b32.cont [14/16] %v808, 128
  %827 = vxpose.xlu0.b32.cont [15/16] %v809, 128
  %828 = vxpose.xlu0.b32.end [16/16] %v810, 128
  %v829 = vpop.trf.xlu0
  %v830 = vpop.trf.xlu0
  %v831 = vpop.trf.xlu0
  %v832 = vpop.trf.xlu0
  %v833 = vpop.trf.xlu0
  %v834 = vpop.trf.xlu0
  %v835 = vpop.trf.xlu0
  %v836 = vpop.trf.xlu0
  %v837 = vpop.trf.xlu0
  %v838 = vpop.trf.xlu0
  %v839 = vpop.trf.xlu0
  %v840 = vpop.trf.xlu0
  %v841 = vpop.trf.xlu0
  %v842 = vpop.trf.xlu0
  %v843 = vpop.trf.xlu0
  %v844 = vpop.trf.xlu0
  %v845 = vpack.c.bf16 %v830, %v829
  %v846 = vpack.c.bf16 %v832, %v831
  %v847 = vpack.c.bf16 %v834, %v833
  %v848 = vpack.c.bf16 %v836, %v835
  %v849 = vpack.c.bf16 %v838, %v837
  %v850 = vpack.c.bf16 %v840, %v839
  %v851 = vpack.c.bf16 %v842, %v841
  %v852 = vpack.c.bf16 %v844, %v843
  %v855 = vunpack.c.l.b16 %v811
  %v856 = vunpack.c.l.b16 %v812
  %v857 = vpack.c.b16 %v856, %v855
  %859 = vmatprep.subr.bf16.mxu0 0
  %860 = vmatpush1.bf16.msra.mxu0 %v845
  %861 = vmatprep.subr.bf16.mxu0 0
  %862 = vmatpush1.bf16.msra.mxu0 %v846
  %863 = vmatprep.subr.bf16.mxu0 0
  %864 = vmatpush1.bf16.msra.mxu0 %v847
  %865 = vmatprep.subr.bf16.mxu0 0
  %866 = vmatpush1.bf16.msra.mxu0 %v848
  %867 = vmatprep.subr.bf16.mxu0 0
  %868 = vmatpush1.bf16.msra.mxu0 %v849
  %869 = vmatprep.subr.bf16.mxu0 0
  %870 = vmatpush1.bf16.msra.mxu0 %v850
  %871 = vmatprep.subr.bf16.mxu0 0
  %872 = vmatpush1.bf16.msra.mxu0 %v851
  %873 = vmatprep.subr.bf16.mxu0 0
  %874 = vmatpush1.bf16.msra.mxu0 %v852
  %875 = vmatprep.subr.bf16.mxu0 0
  %876 = vmatpush1.bf16.msra.mxu0 0
  %877 = vmatprep.subr.bf16.mxu0 0
  %878 = vmatpush1.bf16.msra.mxu0 0
  %879 = vmatprep.subr.bf16.mxu0 0
  %880 = vmatpush1.bf16.msra.mxu0 0
  %881 = vmatprep.subr.bf16.mxu0 0
  %882 = vmatpush1.bf16.msra.mxu0 0
  %883 = vmatprep.subr.bf16.mxu0 0
  %884 = vmatpush1.bf16.msra.mxu0 0
  %885 = vmatprep.subr.bf16.mxu0 0
  %886 = vmatpush1.bf16.msra.mxu0 0
  %887 = vmatprep.subr.bf16.mxu0 0
  %888 = vmatpush1.bf16.msra.mxu0 0
  %889 = vmatprep.subr.bf16.mxu0 0
  %890 = vmatpush1.bf16.msra.mxu0 0
  %891 = vmatprep.mubr.bf16.mxu0 0
  %892 = vmatmul.mubr.bf16.gmra.mrb[0].mxu0 %v857
  %v893 = vpop.f32.mrb[0].mxu0
  %v894 = vadd.f32 0.0, %v893
  %v895 = vpop.f32.mrb[0].mxu0
  %v896 = vpop.f32.mrb[0].mxu0
  %v897 = vpop.f32.mrb[0].mxu0
  %898 = vdwg.mxu0
  %v900 = vrot.slane %v16, 3
  %v902 = vadd.f32 %v894, %v900
  %v903 = vand.u32 2147483647, %v902
  %v904 = vsub.f32 0.0, %v903
  %v905 = vmul.f32 %v904, 1.442695
  %v906 = vpow.pop %v905
  %v907 = vadd.f32 %v906, 1.0
  %v908 = vrcp.pop %v907
  %vm909 = vcmp.ge.f32.partialorder %v902, 0.0
  %v910 = vmul.f32 %v906, %v908
  %v911 = vsel %vm909, %v908, %v910
  %912 = vst [vmem:[%s3] sm:$0x1] %v911
  // Predicated region
  $region14: #{pcont_forward.1} parent=0 // pred_check
    _
  $region15: #{pcont_forward.1} parent=0 // pred_check_branch
    %914 = sbr.rel (0) target = $region17
  $region16: #{pcont_forward.1} parent=0 // pred_region
    _
  $region17: #{pcont_forward.1} parent=0 // pred_fallthru
    _
  // Predicated region
  $region18: #{pcont_forward.1} parent=0 // pred_check
    _
  $region19: #{pcont_forward.1} parent=0 // pred_check_branch
    %916 = sbr.rel (0) target = $region21
  $region20: #{pcont_forward.1} parent=0 // pred_region
    _
  $region21: #{pcont_forward.1} parent=0 // pred_fallthru
    _

</llo_original>
